<compile_context>
chip_gen: v7x
topology: tpu7x:2x2x1
jax: 0.10.0
libtpu: 0.0.40
codegen_flags: <defaults>
</compile_context>

<pallas_src>
import functools

import jax
import jax.numpy as jnp
from jax import lax
from jax.experimental import pallas as pl
from jax.experimental.pallas import tpu as pltpu


def _rmsnorm_kernel(x_ref, w_ref, o_ref, *, eps, inv_dim):
    # x_ref: (row_tile, dim_p), w_ref: (1, dim_p), o_ref: (row_tile, dim_p)
    # Rows are fully independent (per-row reduction), so Pallas' masked stores
    # on a ragged last row-block are safe even though padded rows hold garbage
    # VMEM contents — do NOT turn this into a cross-row reduction.
    x = x_ref[...]
    x_f32 = x.astype(jnp.float32)
    # sum * (1/true_dim) instead of mean, so a zero-padded lane dim still
    # normalizes over the original feature dimension.
    ms = jnp.sum(x_f32 * x_f32, axis=-1, keepdims=True) * inv_dim
    normed = (x_f32 * lax.rsqrt(ms + eps)).astype(x.dtype)  # `.type_as(x)`
    # NOTE: the source module really does `weight + norm(x)` (addition, not
    # the usual elementwise multiplication). Keep it.
    o_ref[...] = (w_ref[...] + normed).astype(o_ref.dtype)


def _round_up(n, m):
    return ((n + m - 1) // m) * m


def _round_down(n, m):
    return (n // m) * m


_MIB = 1024 * 1024


def _tpu_info():
    """Returns (per-core VMEM capacity bytes, is_v7x)."""
    vmem_cap = 64 * _MIB  # conservative fallback
    try:
        vmem_cap = int(pltpu.get_tpu_info().vmem_capacity_bytes)
    except Exception:
        pass
    is_v7x = False
    try:
        kind = jax.devices()[0].device_kind.lower()
        is_v7x = ("v7" in kind) or ("7x" in kind)
    except Exception:
        pass
    if is_v7x:
        # v7x VMEM is 64 MiB *per TensorCore*; clamp in case the query reports
        # the chip-level figure.
        vmem_cap = min(vmem_cap, 64 * _MIB)
    return vmem_cap, is_v7x


def _footprint_bytes(tile, dim_p, x_bytes, out_bytes, w_bytes, n_buf_x):
    """Pipelined VMEM footprint: n_buf_x x-tiles, 2 out-tiles, 2 weight rows,
    plus ~3 full-tile f32 temps (x_f32, x^2, normed) in the body."""
    return dim_p * (
        n_buf_x * tile * x_bytes
        + 2 * tile * out_bytes
        + 2 * w_bytes
        + 3 * tile * 4
    )


def _pick_row_tile(rows, dim_p, x_dtype, out_dtype, w_dtype, vmem_cap, is_v7x):
    x_bytes = jnp.dtype(x_dtype).itemsize
    out_bytes = jnp.dtype(out_dtype).itemsize
    w_bytes = jnp.dtype(w_dtype).itemsize
    # Sublane packing: 8 rows/vreg for 32-bit, 16 for 16-bit, 32 for 8-bit.
    sublane = {4: 8, 2: 16, 1: 32}.get(x_bytes, 8)
    rows_rounded = _round_up(rows, sublane)
    n_buf_x = 3 if is_v7x else 2  # 3-deep input buffering on v7x (3.2 TB/s HBM)

    # (1) Cap each x tile at ~2 MiB: the HBM roofline saturates around
    #     512-row / multi-MiB tiles; larger tiles only cost grid steps and
    #     inflate the full-tile f32 temps.
    tile = max(sublane, _round_down((2 * _MIB) // max(dim_p * x_bytes, 1), sublane))
    tile = min(tile, rows_rounded)

    # (2) Guarantee enough grid steps for the pipeline to reach steady state:
    #     >= 4 everywhere, >= 6 on v7x (2 TensorCores x >= 3 steps each).
    min_steps = 6 if is_v7x else 4
    if rows_rounded >= min_steps * sublane:
        tile = min(tile, max(sublane, _round_down(rows_rounded // min_steps, sublane)))

    # (3) v7x: bias toward an even step count so both TensorCores get equal work.
    if is_v7x:
        t = tile
        for _ in range(16):
            if t < sublane or pl.cdiv(rows_rounded, t) % 2 == 0:
                break
            t -= sublane
        if t >= sublane and pl.cdiv(rows_rounded, t) % 2 == 0:
            tile = t

    # (4) Keep the pipelined footprint comfortably under per-core VMEM.
    while tile > sublane and _footprint_bytes(
        tile, dim_p, x_bytes, out_bytes, w_bytes, n_buf_x
    ) > int(vmem_cap * 0.7):
        tile = max(sublane, _round_down(tile // 2, sublane))

    return tile, sublane, n_buf_x


def rmsnorm_pallas(x, weight, eps=1e-6, *, row_tile=None):
    """x: [..., dim]; weight: [dim]. Returns weight + norm(x.float()).type_as(x)."""
    dim = x.shape[-1]
    orig_shape = x.shape
    x2d = x.reshape(-1, dim)
    rows = x2d.shape[0]

    # Output dtype follows PyTorch promotion: weight dtype + x-dtype tensor
    # (f32 weight + bf16 x -> f32 output; doubles writeback bytes by design).
    out_dtype = jnp.result_type(weight.dtype, x.dtype)

    # Lane-dense layout: pad the feature dim to a multiple of 128 so stores
    # are full-width `vst` rather than masked partial stores; zeros don't
    # perturb the sum-of-squares, and we slice the padding back off below.
    dim_p = _round_up(dim, 128)
    if dim_p != dim:
        x2d = jnp.pad(x2d, ((0, 0), (0, dim_p - dim)))
        w_p = jnp.pad(weight, (0, dim_p - dim))
    else:
        w_p = weight
    w2d = w_p.reshape(1, dim_p)

    # Always query the hardware (even when the caller fixes row_tile) so the
    # vmem limit matches the real part (128 MiB v5e/v6e, 64 MiB/core v7x).
    vmem_cap, is_v7x = _tpu_info()
    auto_tile, sublane, n_buf_x = _pick_row_tile(
        rows, dim_p, x.dtype, out_dtype, weight.dtype, vmem_cap, is_v7x
    )
    if row_tile is None:
        row_tile = auto_tile
    else:
        row_tile = min(_round_up(max(int(row_tile), 1), sublane), _round_up(rows, sublane))

    x_bytes = jnp.dtype(x.dtype).itemsize
    out_bytes = jnp.dtype(out_dtype).itemsize
    w_bytes = jnp.dtype(weight.dtype).itemsize

    # vmem limit sized from the actual footprint (+~30% headroom for Mosaic
    # internal scratch), floored at the 32 MiB scoped default, capped below
    # physical VMEM.
    footprint = _footprint_bytes(row_tile, dim_p, x_bytes, out_bytes, w_bytes, n_buf_x)
    vmem_limit = min(int(vmem_cap * 0.9), max(32 * _MIB, int(footprint * 1.3)))

    cost = pl.CostEstimate(
        flops=4 * rows * dim,  # square, reduce-add, scale-mul, weight-add
        transcendentals=rows,  # one rsqrt per row
        bytes_accessed=rows * dim * (x_bytes + out_bytes) + dim * w_bytes,
    )

    # 3-deep input buffering on v7x keeps the DMA queue full at 3.2 TB/s HBM;
    # keep the default 2-deep pipeline on v5e/v6e.
    x_spec = pl.BlockSpec((row_tile, dim_p), lambda i: (i, 0))
    if is_v7x:
        try:
            x_spec = pl.BlockSpec(
                (row_tile, dim_p), lambda i: (i, 0), pipeline_mode=pl.Buffered(3)
            )
        except TypeError:
            pass  # older API without pipeline_mode: fall back to default buffering

    grid = (pl.cdiv(rows, row_tile),)  # ragged last block handled by Pallas masking
    out = pl.pallas_call(
        functools.partial(_rmsnorm_kernel, eps=eps, inv_dim=1.0 / dim),
        out_shape=jax.ShapeDtypeStruct((rows, dim_p), out_dtype),
        grid_spec=pltpu.PrefetchScalarGridSpec(
            num_scalar_prefetch=0,
            grid=grid,
            in_specs=[
                x_spec,
                pl.BlockSpec((1, dim_p), lambda i: (0, 0)),
            ],
            out_specs=pl.BlockSpec((row_tile, dim_p), lambda i: (i, 0)),
        ),
        compiler_params=pltpu.CompilerParams(
            dimension_semantics=("parallel",),
            vmem_limit_bytes=vmem_limit,
        ),
        cost_estimate=cost,
    )(x2d, w2d)

    if dim_p != dim:
        out = out[:, :dim]
    return out.reshape(*orig_shape[:-1], dim)


def rmsnorm_reference(x, weight, eps=1e-6):
    x_f32 = x.astype(jnp.float32)
    ms = jnp.mean(x_f32 * x_f32, axis=-1, keepdims=True)
    normed = (x_f32 * lax.rsqrt(ms + eps)).astype(x.dtype)
    return weight + normed  # promotes like PyTorch (`weight + norm(x)`, addition)


if __name__ == "__main__":
    # Module init: dim-sized weight of ones, eps=1e-6 (deterministic, per __init__).
    batch, seq, dim = 2, 8, 32
    eps = 1e-6

    key = jax.random.PRNGKey(0)
    x = jax.random.normal(key, (batch, seq, dim), dtype=jnp.float32)
    weight = jnp.ones((dim,), dtype=jnp.float32)

    out = rmsnorm_pallas(x, weight, eps)
    out = jax.block_until_ready(out)

    ref = rmsnorm_reference(x, weight, eps)
    assert out.shape == ref.shape and out.dtype == ref.dtype
    assert jnp.allclose(out, ref, atol=1e-5, rtol=1e-5)

    print("KERNEL_OK")
</pallas_src>

<mosaic_0001>
module attributes {stable_mosaic.version = 11 : i64} {
  func.func @_rmsnorm_kernel(%arg0: i32, %arg1: memref<16x128xf32, #tpu.memory_space<vmem>>, %arg2: memref<1x128xf32, #tpu.memory_space<vmem>>, %arg3: memref<16x128xf32, #tpu.memory_space<vmem>>) attributes {dimension_semantics = [#tpu.dimension_semantics<parallel>], iteration_bounds = array<i64: 1>, scalar_prefetch = 0 : i64, scratch_operands = 0 : i64, tpu.core_type = #tpu.core_type<tc>, window_params = [{transform_indices = @transform_0, window_bounds = array<i64: 16, 128>}, {pipeline_mode = #tpu.pipeline_mode<synchronous>, transform_indices = @transform_1, window_bounds = array<i64: 1, 128>}, {transform_indices = @transform_2, window_bounds = array<i64: 16, 128>}]} {
    %c0 = arith.constant 0 : index
    %c0_0 = arith.constant 0 : index
    %0 = vector.load %arg1[%c0, %c0_0] : memref<16x128xf32, #tpu.memory_space<vmem>>, vector<16x128xf32>
    %1 = arith.mulf %0, %0 : vector<16x128xf32>
    %cst = arith.constant dense<0.000000e+00> : vector<16xf32>
    %2 = vector.multi_reduction <add>, %1, %cst [1] : vector<16x128xf32> to vector<16xf32>
    %3 = vector.shape_cast %2 : vector<16xf32> to vector<16x1xf32>
    %cst_1 = arith.constant 3.125000e-02 : f32
    %4 = vector.broadcast %cst_1 : f32 to vector<16x1xf32>
    %5 = arith.mulf %3, %4 : vector<16x1xf32>
    %cst_2 = arith.constant 9.99999997E-7 : f32
    %6 = vector.broadcast %cst_2 : f32 to vector<16x1xf32>
    %7 = arith.addf %5, %6 : vector<16x1xf32>
    %8 = math.rsqrt %7 : vector<16x1xf32>
    %9 = vector.broadcast %8 : vector<16x1xf32> to vector<16x128xf32>
    %10 = arith.mulf %0, %9 : vector<16x128xf32>
    %c0_3 = arith.constant 0 : index
    %c0_4 = arith.constant 0 : index
    %11 = vector.load %arg2[%c0_3, %c0_4] : memref<1x128xf32, #tpu.memory_space<vmem>>, vector<1x128xf32>
    %12 = vector.broadcast %11 : vector<1x128xf32> to vector<16x128xf32>
    %13 = arith.addf %12, %10 : vector<16x128xf32>
    %c0_5 = arith.constant 0 : index
    %c0_6 = arith.constant 0 : index
    %14 = vector.load %arg3[%c0_5, %c0_6] : memref<16x128xf32, #tpu.memory_space<vmem>>, vector<16x128xf32>
    tpu.vector_store %arg3[%c0_5, %c0_6], %13 {strides = array<i32>} : memref<16x128xf32, #tpu.memory_space<vmem>>, vector<16x128xf32>,
    return
  }
  func.func @transform_0(%arg0: i32) -> (i32, i32) {
    %c0_i32 = arith.constant 0 : i32
    %c0_i32_0 = arith.constant 0 : i32
    return %arg0, %c0_i32 : i32, i32
  }
  func.func @transform_1(%arg0: i32) -> (i32, i32) {
    %c0_i32 = arith.constant 0 : i32
    %c0_i32_0 = arith.constant 0 : i32
    %c0_i32_1 = arith.constant 0 : i32
    return %c0_i32, %c0_i32_0 : i32, i32
  }
  func.func @transform_2(%arg0: i32) -> (i32, i32) {
    %c0_i32 = arith.constant 0 : i32
    %c0_i32_0 = arith.constant 0 : i32
    return %arg0, %c0_i32 : i32, i32
  }
}

</mosaic_0001>

<llo_original>
// kernel: tpu_custom_call.1
$region0: #{tpu_custom_call.1}
  #allocation0 [shape = 'u32[]', space=smem, size = 0x4, offset = 0x4, fixed_abs, tag = 'smem constant byte address 0x4 - core index']
  #allocation1 [shape = 'u32[144,128]{1,0:T(1,128)}', space=vmem, size = 0x12000, scoped, tag = 'internal scratch']
  %s0 = inlined_call_operand.hbm [shape: f32[16,128], index: 0, kind: input, shape index: {}]
  %s1 = inlined_call_operand.vmem [shape: f32[1,128], index: 1, kind: input, shape index: {}]
  %s2 = inlined_call_operand.hbm [shape: f32[16,128], index: 2, kind: output, shape index: {}]
  %s3 = sld [smem:[#allocation0]]
  $region22: #{tpu_custom_call.1} parent=0
    _
  %s5 = ssub.s32 1, %s3
  %s6 = scalar_select 0, %s5, %s3
  $region1: #{tpu_custom_call.1} parent=0
    #allocation2 [shape = 'u8[8192]{0}', space=vmem, size = 0x2000, scoped, tag = 'input window, operand 0, single buffered']
    #allocation3 [shape = 's32[1]{0}', space=sflag, size = 0x4, scoped, tag = 'scoped memory for tpu_custom_call.1']
    #allocation4 [shape = 's32[1]{0}', space=sflag, size = 0x4, scoped, tag = 'scoped memory for tpu_custom_call.1']
    #allocation5 [shape = 'u8[8192]{0}', space=vmem, size = 0x2000, scoped, tag = 'output window, operand 0, single buffered']
    %7 = vsyncpa [#allocation3], 0
    %8 = vsyncpa [#allocation4], 0
    // Predicated region
    $region2: #{tpu_custom_call.1} parent=1 // pred_check
      _
    $region3: #{tpu_custom_call.1} parent=1 // pred_check_branch
      %10 = sbr.rel (0) target = $region5
    $region4: #{tpu_custom_call.1} parent=1 // pred_region
      %s12 = ssub.s32 256, 256
      %13 = vsyncadd [#allocation3], %s12
      %s14 = sshll.u32 [#allocation2], 4
      %s15 = int_to_ptr.vmem [resolvable:$true] %s14
      %20 = dma.hbm_to_vmem [thread:$0]  %s0, 256, %s15, [#allocation3], 128, 128, 8
    $region5: #{tpu_custom_call.1} parent=1 // pred_fallthru
      _
    // Predicated region
    $region6: #{tpu_custom_call.1} parent=1 // pred_check
      _
    $region7: #{tpu_custom_call.1} parent=1 // pred_check_branch
      %22 = sbr.rel (0) target = $region9
    $region8: #{tpu_custom_call.1} parent=1 // pred_region
      _
    $region9: #{tpu_custom_call.1} parent=1 // pred_fallthru
      _
    // Predicated region
    $region10: #{tpu_custom_call.1} parent=1 // pred_check
      _
    $region11: #{tpu_custom_call.1} parent=1 // pred_check_branch
      %24 = sbr.rel (0) target = $region13
    $region12: #{tpu_custom_call.1} parent=1 // pred_region
      %25 = dma.done [#allocation3], 256
    $region13: #{tpu_custom_call.1} parent=1 // pred_fallthru
      _
    %v26 = vld [vmem:[#allocation2] sm:$0xff]
    %v27 = vld [vmem:[#allocation2 + $0x8] sm:$0xff]
    %v28 = vmul.f32 %v26, %v26
    %v29 = vmul.f32 %v27, %v27
    %30 = vadd.xlane.f32.xlu0 %v28
    %v31 = vpop.xlane.xlu0 %30
    %32 = vadd.xlane.f32.xlu0 %v29
    %v33 = vpop.xlane.xlu0 %32
    %v34 = vmul.f32 %v31, 0.03125
    %v35 = vmul.f32 %v33, 0.03125
    %v36 = vadd.f32 %v34, 1e-06
    %v37 = vadd.f32 %v35, 1e-06
    %v38 = vrsqrt.pop %v36
    %v39 = vrsqrt.pop %v37
    %v40 = vmul.f32 %v26, %v38
    %v41 = vmul.f32 %v27, %v39
    %v42 = vld [vmem:[%s1] sm:$0x1]
    %v44 = vlaneseq
    %v45 = vshrl.u32 %v44, 7
    %v46 = vsub.s32 0, %v45
    %v47 = vrot.slane %v42, %v46
    %v49 = vadd.f32 %v47, %v40
    %v50 = vadd.f32 %v47, %v41
    %51 = vst [vmem:[#allocation5] sm:$0xff] %v49
    %52 = vst [vmem:[#allocation5 + $0x8] sm:$0xff] %v50
    // Predicated region
    $region14: #{tpu_custom_call.1} parent=1 // pred_check
      _
    $region15: #{tpu_custom_call.1} parent=1 // pred_check_branch
      %54 = sbr.rel (0) target = $region17
    $region16: #{tpu_custom_call.1} parent=1 // pred_region
      %s56 = ssub.s32 256, 256
      %57 = vsyncadd [#allocation4], %s56
      %s58 = sshll.u32 [#allocation5], 4
      %s59 = int_to_ptr.vmem [resolvable:$true] %s58
      %64 = dma.vmem_to_hbm [thread:$0]  %s59, 256, %s2, [#allocation4], 128, 128, 8
    $region17: #{tpu_custom_call.1} parent=1 // pred_fallthru
      _
    // Predicated region
    $region18: #{tpu_custom_call.1} parent=1 // pred_check
      _
    $region19: #{tpu_custom_call.1} parent=1 // pred_check_branch
      %66 = sbr.rel (0) target = $region21
    $region20: #{tpu_custom_call.1} parent=1 // pred_region
      %67 = dma.done [#allocation4], 256
    $region21: #{tpu_custom_call.1} parent=1 // pred_fallthru
      _
    %68 = vsyncpa [#allocation3], 1
    %69 = vsyncpa [#allocation4], 1

</llo_original>
